<compile_context>
chip_gen: v7x
topology: tpu7x:2x2x1
jax: 0.10.0
libtpu: 0.0.40
codegen_flags: <defaults>
</compile_context>

<pallas_src>
import functools

import jax
import jax.numpy as jnp
from jax.experimental import pallas as pl
from jax.experimental.pallas import tpu as pltpu

_LANE = 128
_SUBLANE = 8


def _round_up(x, m):
    return ((x + m - 1) // m) * m


def _cdiv(a, b):
    return -(-a // b)


def _native_sublanes(dtype):
    """Native second-to-last tile dim: 8 for 4-byte, 16 for 2-byte, 32 for 1-byte."""
    itemsize = jnp.dtype(dtype).itemsize
    return _SUBLANE * max(1, 4 // itemsize)


def _choose_chunk_rows(cout, native_sublanes):
    """Sublane rows processed per strip inside the kernel.

    Keeps (Cout f32 accumulators + upcast input slice + headroom) under ~48
    vregs so the channel-interchanged loop never spills."""
    budget_rows = (48 * _SUBLANE) // (cout + 2)
    chunk = (budget_rows // native_sublanes) * native_sublanes
    return max(native_sublanes, min(64, chunk))


def _choose_block_voxels(n, s_pad, granule, bytes_per_voxel, target_voxels):
    """Spatial tile (voxels): multiple of `granule`, as large as allowed.

    Caps: (a) keep >= ~2 grid steps per TensorCore when possible (v7x has 2),
    (b) keep double-buffered in+out blocks under ~12 MiB (below v5e's ~16 MiB
    scoped-VMEM default), (c) absolute cap of 128K voxels."""
    tgt = max(granule, (target_voxels // granule) * granule)
    min_spatial_tiles = max(1, _cdiv(4, n))              # >= ~4 total steps
    step_cap = max(granule, _round_up(_cdiv(s_pad, min_spatial_tiles), granule))
    vmem_budget = 12 * 1024 * 1024                        # double-buffered bytes
    vmem_cap = max(granule,
                   (vmem_budget // (2 * bytes_per_voxel) // granule) * granule)
    hard_cap = 128 * 1024
    blk = min(tgt, step_cap, vmem_cap, hard_cap, _round_up(s_pad, granule))
    return max(granule, blk)


def _conv1x1_kernel(x_ref, w_ref, b_ref, o_ref, *, cin, cout, tr, chunk):
    """Per-voxel channel mixing on one spatial tile.

    x_ref: (1, cin, TR, 128) VMEM block
    w_ref: (cout, cin) f32 in SMEM (scalar reads)
    b_ref: (cout,)     f32 in SMEM (scalar reads)
    o_ref: (1, cout, TR, 128) VMEM block

    Channel loops are interchanged (ci outer): each input-channel slice is
    loaded/upcast once and accumulated into `cout` running f32 accumulators,
    so vector-load pressure is ~Cin (not Cin*Cout) per vreg position.  TR is
    strip-mined into `chunk`-row sub-tiles to bound the vreg footprint.
    """
    r0 = 0
    while r0 < tr:
        rows = min(chunk, tr - r0)
        accs = [None] * cout
        for ci in range(cin):
            xc = x_ref[0, ci, pl.ds(r0, rows), :].astype(jnp.float32)
            for co in range(cout):
                term = xc * w_ref[co, ci]
                accs[co] = term if accs[co] is None else accs[co] + term
        for co in range(cout):
            o_ref[0, co, pl.ds(r0, rows), :] = (accs[co] + b_ref[co]).astype(o_ref.dtype)
        r0 += rows


def out_conv3d_1x1(x_ncdhw, weight, bias, *, target_block_voxels=64 * 1024):
    """nn.Conv3d(in_channels, out_channels, kernel_size=1) forward.

    x_ncdhw: (N, Cin, D, H, W)
    weight : (Cout, Cin) or (Cout, Cin, 1, 1, 1)
    bias   : (Cout,)
    returns: (N, Cout, D, H, W)
    """
    N, Cin, D, H, W = x_ncdhw.shape
    Cout = bias.shape[0]
    w2 = weight.reshape(Cout, -1).astype(jnp.float32)
    assert w2.shape == (Cout, Cin)
    b1 = bias.reshape(Cout).astype(jnp.float32)

    dtype = x_ncdhw.dtype
    itemsize = jnp.dtype(dtype).itemsize
    nsub = _native_sublanes(dtype)
    granule = nsub * _LANE

    S = D * H * W
    # Pad only up to the dtype-native (sublane,lane) granule (not up to the
    # tile).  The partial final grid block is handled by Pallas: garbage input
    # rows past R only feed output rows past R, which are discarded.
    S_pad = _round_up(S, granule)
    blk = _choose_block_voxels(N, S_pad, granule, (Cin + Cout) * itemsize,
                               target_block_voxels)
    TR = blk // _LANE          # sublane rows per spatial tile
    R = S_pad // _LANE         # total sublane rows

    # NCDHW -> (N, Cin, S): contiguous (free) reshape, no transpose.
    x3 = x_ncdhw.reshape(N, Cin, S)
    if S_pad != S:
        x3 = jnp.pad(x3, ((0, 0), (0, 0), (0, S_pad - S)))
    x4 = x3.reshape(N, Cin, R, _LANE)

    chunk = _choose_chunk_rows(Cout, nsub)
    kernel = functools.partial(_conv1x1_kernel, cin=Cin, cout=Cout,
                               tr=TR, chunk=chunk)

    grid = (N, _cdiv(R, TR))
    cost = pl.CostEstimate(
        flops=2 * N * S_pad * Cin * Cout,
        transcendentals=0,
        bytes_accessed=(Cin + Cout) * N * S_pad * itemsize
        + w2.size * 4 + b1.size * 4,
    )

    y4 = pl.pallas_call(
        kernel,
        out_shape=jax.ShapeDtypeStruct((N, Cout, R, _LANE), dtype),
        grid=grid,
        in_specs=[
            pl.BlockSpec((1, Cin, TR, _LANE), lambda n, s: (n, 0, s, 0)),
            pl.BlockSpec(memory_space=pltpu.MemorySpace.SMEM),  # weight (Cout, Cin)
            pl.BlockSpec(memory_space=pltpu.MemorySpace.SMEM),  # bias (Cout,)
        ],
        out_specs=pl.BlockSpec((1, Cout, TR, _LANE), lambda n, s: (n, 0, s, 0)),
        compiler_params=pltpu.CompilerParams(
            dimension_semantics=("parallel", "parallel")),
        cost_estimate=cost,
    )(x4, w2, b1)

    y3 = y4.reshape(N, Cout, S_pad)
    if S_pad != S:
        y3 = y3[:, :, :S]
    return y3.reshape(N, Cout, D, H, W)


if __name__ == "__main__":
    key = jax.random.PRNGKey(0)
    k_x, k_w, k_b, k_x2, k_x3 = jax.random.split(key, 5)

    # Shapes consistent with the module: Conv3d(in_channels=4, out_channels=3, k=1)
    N, Cin, Cout = 2, 4, 3
    bound = 1.0 / (Cin ** 0.5)
    weight = jax.random.uniform(k_w, (Cout, Cin, 1, 1, 1),
                                minval=-bound, maxval=bound, dtype=jnp.float32)
    bias = jax.random.uniform(k_b, (Cout,),
                              minval=-bound, maxval=bound, dtype=jnp.float32)
    w2 = weight.reshape(Cout, Cin)

    def ref(xv):
        return jnp.einsum("ncdhw,oc->nodhw", xv, w2) + bias[None, :, None, None, None]

    # 1) Aligned spatial size (16^3): blk divides S exactly.
    x = jax.random.normal(k_x, (N, Cin, 16, 16, 16), dtype=jnp.float32)
    y = jax.block_until_ready(out_conv3d_1x1(x, weight, bias))
    assert y.shape == (N, Cout, 16, 16, 16)
    assert jnp.allclose(y, ref(x), atol=1e-5, rtol=1e-5)

    # 2) Ragged spatial size (pads only to the 1024-voxel granule, then slices).
    x2 = jax.random.normal(k_x2, (N, Cin, 7, 6, 5), dtype=jnp.float32)
    y2 = jax.block_until_ready(out_conv3d_1x1(x2, weight, bias))
    assert y2.shape == (N, Cout, 7, 6, 5)
    assert jnp.allclose(y2, ref(x2), atol=1e-5, rtol=1e-5)

    # 3) 128-aligned S where the tile does NOT divide S (partial final block path).
    x3 = jax.random.normal(k_x3, (N, Cin, 20, 16, 16), dtype=jnp.float32)
    y3 = jax.block_until_ready(out_conv3d_1x1(x3, weight, bias))
    assert y3.shape == (N, Cout, 20, 16, 16)
    assert jnp.allclose(y3, ref(x3), atol=1e-5, rtol=1e-5)

    print("KERNEL_OK")
</pallas_src>

<mosaic_0001>
module attributes {stable_mosaic.version = 11 : i64} {
  func.func @_conv1x1_kernel(%arg0: i32, %arg1: i32, %arg2: memref<1x4x16x128xf32, #tpu.memory_space<vmem>>, %arg3: memref<3x4xf32, #tpu.memory_space<smem>>, %arg4: memref<3xf32, #tpu.memory_space<smem>>, %arg5: memref<1x3x16x128xf32, #tpu.memory_space<vmem>>) attributes {dimension_semantics = [#tpu.dimension_semantics<parallel>, #tpu.dimension_semantics<parallel>], iteration_bounds = array<i64: 2, 2>, scalar_prefetch = 0 : i64, scratch_operands = 0 : i64, tpu.core_type = #tpu.core_type<tc>, window_params = [{transform_indices = @transform_0, window_bounds = array<i64: 1, 4, 16, 128>}, {transform_indices = @transform_1, window_bounds = array<i64: 3, 4>}, {transform_indices = @transform_2, window_bounds = array<i64: 3>}, {transform_indices = @transform_3, window_bounds = array<i64: 1, 3, 16, 128>}]} {
    %c0 = arith.constant 0 : index
    %c0_0 = arith.constant 0 : index
    %c0_1 = arith.constant 0 : index
    %c0_2 = arith.constant 0 : index
    %0 = vector.load %arg2[%c0, %c0_0, %c0_1, %c0_2] : memref<1x4x16x128xf32, #tpu.memory_space<vmem>>, vector<1x1x16x128xf32>
    %1 = vector.shape_cast %0 : vector<1x1x16x128xf32> to vector<16x128xf32>
    %c0_3 = arith.constant 0 : index
    %c0_4 = arith.constant 0 : index
    %2 = memref.load %arg3[%c0_3, %c0_4] : memref<3x4xf32, #tpu.memory_space<smem>>
    %3 = vector.broadcast %2 : f32 to vector<16x128xf32>
    %4 = arith.mulf %1, %3 : vector<16x128xf32>
    %c1 = arith.constant 1 : index
    %c0_5 = arith.constant 0 : index
    %5 = memref.load %arg3[%c1, %c0_5] : memref<3x4xf32, #tpu.memory_space<smem>>
    %6 = vector.broadcast %5 : f32 to vector<16x128xf32>
    %7 = arith.mulf %1, %6 : vector<16x128xf32>
    %c2 = arith.constant 2 : index
    %c0_6 = arith.constant 0 : index
    %8 = memref.load %arg3[%c2, %c0_6] : memref<3x4xf32, #tpu.memory_space<smem>>
    %9 = vector.broadcast %8 : f32 to vector<16x128xf32>
    %10 = arith.mulf %1, %9 : vector<16x128xf32>
    %c0_7 = arith.constant 0 : index
    %c1_8 = arith.constant 1 : index
    %c0_9 = arith.constant 0 : index
    %c0_10 = arith.constant 0 : index
    %11 = vector.load %arg2[%c0_7, %c1_8, %c0_9, %c0_10] : memref<1x4x16x128xf32, #tpu.memory_space<vmem>>, vector<1x1x16x128xf32>
    %12 = vector.shape_cast %11 : vector<1x1x16x128xf32> to vector<16x128xf32>
    %c0_11 = arith.constant 0 : index
    %c1_12 = arith.constant 1 : index
    %13 = memref.load %arg3[%c0_11, %c1_12] : memref<3x4xf32, #tpu.memory_space<smem>>
    %14 = vector.broadcast %13 : f32 to vector<16x128xf32>
    %15 = arith.mulf %12, %14 : vector<16x128xf32>
    %16 = arith.addf %4, %15 : vector<16x128xf32>
    %c1_13 = arith.constant 1 : index
    %c1_14 = arith.constant 1 : index
    %17 = memref.load %arg3[%c1_13, %c1_14] : memref<3x4xf32, #tpu.memory_space<smem>>
    %18 = vector.broadcast %17 : f32 to vector<16x128xf32>
    %19 = arith.mulf %12, %18 : vector<16x128xf32>
    %20 = arith.addf %7, %19 : vector<16x128xf32>
    %c2_15 = arith.constant 2 : index
    %c1_16 = arith.constant 1 : index
    %21 = memref.load %arg3[%c2_15, %c1_16] : memref<3x4xf32, #tpu.memory_space<smem>>
    %22 = vector.broadcast %21 : f32 to vector<16x128xf32>
    %23 = arith.mulf %12, %22 : vector<16x128xf32>
    %24 = arith.addf %10, %23 : vector<16x128xf32>
    %c0_17 = arith.constant 0 : index
    %c2_18 = arith.constant 2 : index
    %c0_19 = arith.constant 0 : index
    %c0_20 = arith.constant 0 : index
    %25 = vector.load %arg2[%c0_17, %c2_18, %c0_19, %c0_20] : memref<1x4x16x128xf32, #tpu.memory_space<vmem>>, vector<1x1x16x128xf32>
    %26 = vector.shape_cast %25 : vector<1x1x16x128xf32> to vector<16x128xf32>
    %c0_21 = arith.constant 0 : index
    %c2_22 = arith.constant 2 : index
    %27 = memref.load %arg3[%c0_21, %c2_22] : memref<3x4xf32, #tpu.memory_space<smem>>
    %28 = vector.broadcast %27 : f32 to vector<16x128xf32>
    %29 = arith.mulf %26, %28 : vector<16x128xf32>
    %30 = arith.addf %16, %29 : vector<16x128xf32>
    %c1_23 = arith.constant 1 : index
    %c2_24 = arith.constant 2 : index
    %31 = memref.load %arg3[%c1_23, %c2_24] : memref<3x4xf32, #tpu.memory_space<smem>>
    %32 = vector.broadcast %31 : f32 to vector<16x128xf32>
    %33 = arith.mulf %26, %32 : vector<16x128xf32>
    %34 = arith.addf %20, %33 : vector<16x128xf32>
    %c2_25 = arith.constant 2 : index
    %c2_26 = arith.constant 2 : index
    %35 = memref.load %arg3[%c2_25, %c2_26] : memref<3x4xf32, #tpu.memory_space<smem>>
    %36 = vector.broadcast %35 : f32 to vector<16x128xf32>
    %37 = arith.mulf %26, %36 : vector<16x128xf32>
    %38 = arith.addf %24, %37 : vector<16x128xf32>
    %c0_27 = arith.constant 0 : index
    %c3 = arith.constant 3 : index
    %c0_28 = arith.constant 0 : index
    %c0_29 = arith.constant 0 : index
    %39 = vector.load %arg2[%c0_27, %c3, %c0_28, %c0_29] : memref<1x4x16x128xf32, #tpu.memory_space<vmem>>, vector<1x1x16x128xf32>
    %40 = vector.shape_cast %39 : vector<1x1x16x128xf32> to vector<16x128xf32>
    %c0_30 = arith.constant 0 : index
    %c3_31 = arith.constant 3 : index
    %41 = memref.load %arg3[%c0_30, %c3_31] : memref<3x4xf32, #tpu.memory_space<smem>>
    %42 = vector.broadcast %41 : f32 to vector<16x128xf32>
    %43 = arith.mulf %40, %42 : vector<16x128xf32>
    %44 = arith.addf %30, %43 : vector<16x128xf32>
    %c1_32 = arith.constant 1 : index
    %c3_33 = arith.constant 3 : index
    %45 = memref.load %arg3[%c1_32, %c3_33] : memref<3x4xf32, #tpu.memory_space<smem>>
    %46 = vector.broadcast %45 : f32 to vector<16x128xf32>
    %47 = arith.mulf %40, %46 : vector<16x128xf32>
    %48 = arith.addf %34, %47 : vector<16x128xf32>
    %c2_34 = arith.constant 2 : index
    %c3_35 = arith.constant 3 : index
    %49 = memref.load %arg3[%c2_34, %c3_35] : memref<3x4xf32, #tpu.memory_space<smem>>
    %50 = vector.broadcast %49 : f32 to vector<16x128xf32>
    %51 = arith.mulf %40, %50 : vector<16x128xf32>
    %52 = arith.addf %38, %51 : vector<16x128xf32>
    %c0_36 = arith.constant 0 : index
    %53 = memref.load %arg4[%c0_36] : memref<3xf32, #tpu.memory_space<smem>>
    %54 = vector.broadcast %53 : f32 to vector<16x128xf32>
    %55 = arith.addf %44, %54 : vector<16x128xf32>
    %c0_37 = arith.constant 0 : index
    %c0_38 = arith.constant 0 : index
    %c0_39 = arith.constant 0 : index
    %c0_40 = arith.constant 0 : index
    %56 = vector.load %arg5[%c0_37, %c0_38, %c0_39, %c0_40] : memref<1x3x16x128xf32, #tpu.memory_space<vmem>>, vector<1x1x16x128xf32>
    %57 = vector.shape_cast %56 : vector<1x1x16x128xf32> to vector<16x128xf32>
    %58 = vector.shape_cast %55 : vector<16x128xf32> to vector<1x1x16x128xf32>
    tpu.vector_store %arg5[%c0_37, %c0_38, %c0_39, %c0_40], %58 {strides = array<i32>} : memref<1x3x16x128xf32, #tpu.memory_space<vmem>>, vector<1x1x16x128xf32>,
    %c1_41 = arith.constant 1 : index
    %59 = memref.load %arg4[%c1_41] : memref<3xf32, #tpu.memory_space<smem>>
    %60 = vector.broadcast %59 : f32 to vector<16x128xf32>
    %61 = arith.addf %48, %60 : vector<16x128xf32>
    %c0_42 = arith.constant 0 : index
    %c1_43 = arith.constant 1 : index
    %c0_44 = arith.constant 0 : index
    %c0_45 = arith.constant 0 : index
    %62 = vector.load %arg5[%c0_42, %c1_43, %c0_44, %c0_45] : memref<1x3x16x128xf32, #tpu.memory_space<vmem>>, vector<1x1x16x128xf32>
    %63 = vector.shape_cast %62 : vector<1x1x16x128xf32> to vector<16x128xf32>
    %64 = vector.shape_cast %61 : vector<16x128xf32> to vector<1x1x16x128xf32>
    tpu.vector_store %arg5[%c0_42, %c1_43, %c0_44, %c0_45], %64 {strides = array<i32>} : memref<1x3x16x128xf32, #tpu.memory_space<vmem>>, vector<1x1x16x128xf32>,
    %c2_46 = arith.constant 2 : index
    %65 = memref.load %arg4[%c2_46] : memref<3xf32, #tpu.memory_space<smem>>
    %66 = vector.broadcast %65 : f32 to vector<16x128xf32>
    %67 = arith.addf %52, %66 : vector<16x128xf32>
    %c0_47 = arith.constant 0 : index
    %c2_48 = arith.constant 2 : index
    %c0_49 = arith.constant 0 : index
    %c0_50 = arith.constant 0 : index
    %68 = vector.load %arg5[%c0_47, %c2_48, %c0_49, %c0_50] : memref<1x3x16x128xf32, #tpu.memory_space<vmem>>, vector<1x1x16x128xf32>
    %69 = vector.shape_cast %68 : vector<1x1x16x128xf32> to vector<16x128xf32>
    %70 = vector.shape_cast %67 : vector<16x128xf32> to vector<1x1x16x128xf32>
    tpu.vector_store %arg5[%c0_47, %c2_48, %c0_49, %c0_50], %70 {strides = array<i32>} : memref<1x3x16x128xf32, #tpu.memory_space<vmem>>, vector<1x1x16x128xf32>,
    return
  }
  func.func @transform_0(%arg0: i32, %arg1: i32) -> (i32, i32, i32, i32) {
    %c0_i32 = arith.constant 0 : i32
    %c0_i32_0 = arith.constant 0 : i32
    %c0_i32_1 = arith.constant 0 : i32
    return %arg0, %c0_i32, %arg1, %c0_i32_0 : i32, i32, i32, i32
  }
  func.func @transform_1(%arg0: i32, %arg1: i32) -> (i32, i32) {
    %c0_i32 = arith.constant 0 : i32
    %c0_i32_0 = arith.constant 0 : i32
    %c0_i32_1 = arith.constant 0 : i32
    return %c0_i32, %c0_i32_0 : i32, i32
  }
  func.func @transform_2(%arg0: i32, %arg1: i32) -> i32 {
    %c0_i32 = arith.constant 0 : i32
    %c0_i32_0 = arith.constant 0 : i32
    return %c0_i32 : i32
  }
  func.func @transform_3(%arg0: i32, %arg1: i32) -> (i32, i32, i32, i32) {
    %c0_i32 = arith.constant 0 : i32
    %c0_i32_0 = arith.constant 0 : i32
    %c0_i32_1 = arith.constant 0 : i32
    return %arg0, %c0_i32, %arg1, %c0_i32_0 : i32, i32, i32, i32
  }
}

</mosaic_0001>

<llo_original>
// kernel: tpu_custom_call.1
$region0: #{tpu_custom_call.1}
  #allocation0 [shape = 'u32[]', space=smem, size = 0x4, offset = 0x4, fixed_abs, tag = 'smem constant byte address 0x4 - core index']
  #allocation1 [shape = 'u32[144,128]{1,0:T(1,128)}', space=vmem, size = 0x12000, scoped, tag = 'internal scratch']
  #allocation10 [shape = 's32[]', space=sflag, size = 0x4, offset = 0, fixed_abs, tag = 'sflag constant byte address 0x0 - dummy sync flag']
  #allocation12 [shape = 's32[]', space=sflag, size = 0x4, offset = 0, fixed_abs, tag = 'sflag constant byte address 0x0 - dummy sync flag']
  %s0 = inlined_call_operand.hbm [shape: f32[2,4,32,128], index: 0, kind: input, shape index: {}]
  %s1 = inlined_call_operand.hbm [shape: f32[3,4], index: 1, kind: input, shape index: {}]
  %s2 = inlined_call_operand.vmem [shape: f32[3], index: 2, kind: input, shape index: {}]
  %s3 = inlined_call_operand.hbm [shape: f32[2,3,32,128], index: 3, kind: output, shape index: {}]
  %s4 = sld [smem:[#allocation0]]
  $region57: #{tpu_custom_call.1} parent=0
    _
  %s6 = ssub.s32 1, %s4
  %s7 = scalar_select 0, %s6, %s4
  $region1: #{tpu_custom_call.1} parent=0
    #allocation2 [shape = 'u8[65536]{0}', space=vmem, size = 0x10000, scoped, tag = 'input window, operand 0']
    #allocation3 [shape = 's32[2]{0}', space=sflag, size = 0x8, scoped, tag = 'scoped memory for tpu_custom_call.1']
    #allocation4 [shape = 's32[2]{0}', space=sflag, size = 0x8, scoped, tag = 'scoped memory for tpu_custom_call.1']
    #allocation5 [shape = 's32[2]{0}', space=sflag, size = 0x8, scoped, tag = 'scoped memory for tpu_custom_call.1']
    #allocation6 [shape = 's32[2]{0}', space=sflag, size = 0x8, scoped, tag = 'scoped memory for tpu_custom_call.1']
    #allocation7 [shape = 'u8[2048]{0}', space=smem, size = 0x800, scoped, tag = 'input window, operand 1, single buffered']
    #allocation8 [shape = 'u8[512]{0}', space=smem, size = 0x200, scoped, tag = 'input window, operand 2, single buffered']
    #allocation9 [shape = 'u8[49152]{0}', space=vmem, size = 0xc000, scoped, tag = 'output window, operand 0']
    %8 = vsyncpa [#allocation3], 0
    %s9 = scalar_lea.sflag [#allocation3], 1
    %10 = vsyncpa %s9, 0
    %11 = vsyncpa [#allocation5], 0
    %12 = vsyncpa [#allocation6], 0
    %13 = vsyncpa [#allocation4], 0
    %s14 = scalar_lea.sflag [#allocation4], 1
    %15 = vsyncpa %s14, 0
    loop: start=0, step=1, limit=6
    $region2: #{tpu_custom_call.1} parent=1 // loop_pre_header
      _
    $region3: #{tpu_custom_call.1} parent=1 // loop_header
      %s17 = sphi 0, %s21
      %p18 = scmp.ge.s32.totalorder %s17, 6
      %s24 = sphi 0, %s36
      %s25 = sphi 0, %s32
      %s26 = sphi 0, %s24
      %s27 = sphi 0, %s25
      %s28 = sphi 0, %s26
      %s29 = sphi 0, %s27
      %s41 = sphi 0, %s43
      %s44 = sphi 0, %s41
      %s45 = sphi 0, %s44
      %s61 = sphi 0, %s45
      %s65 = sphi 0, %s65
      %s67 = sphi 0, %s65
      %s68 = sphi 0, %s67
      %s82 = sphi 0, %s68
      %s86 = sphi 0, %s86
      %s88 = sphi 0, %s86
      %s89 = sphi 0, %s88
      %s103 = sphi 0, %s89
      %s111 = sphi 0, %s113
      %s114 = sphi 0, %s111
      %s115 = sphi 0, %s114
      %s131 = sphi 0, %s115
    $region4: #{tpu_custom_call.1} parent=1 // loop_header_branch
      %20 = sbr.rel (%p18) target = $region8
    $region5: #{tpu_custom_call.1} parent=1 // loop_body
      %s22 = ssub.s32 %s17, 1
      %s23 = ssub.s32 %s17, 2
      %s30 = sadd.s32 1, %s25
      %p31 = scmp.ge.s32.totalorder %s30, 2
      %s32 = scalar_select %p31, 0, %s30
      %s33 = sadd.s32 1, %s24
      %s34 = scalar_select %p31, %s33, %s24
      %p35 = scmp.ge.s32.totalorder %s34, 2
      %s36 = scalar_select %p35, 0, %s34
      %s37 = ssub.s32 %s24, %s36
      %s38 = ssub.s32 %s25, %s32
      %s39 = sor.u32 %s37, %s38
      %p40 = scmp.eq.s32.totalorder %s39, 0
      %s42 = sadd.s32 %s41, 1
      %s43 = scalar_select %p40, %s41, %s42
      %p46 = pneg %p40
      %p47 = scmp.eq.s32.totalorder %s17, 3
      %p48 = por %p46, %p47
      %p49 = scmp.ne.s32.totalorder %s41, %s44
      %p50 = scmp.eq.s32.totalorder %s17, 0
      %p51 = por %p49, %p50
      %p52 = scmp.ne.s32.totalorder %s41, %s44
      %p53 = scmp.eq.s32.totalorder %s22, 3
      %p54 = por %p52, %p53
      %p55 = scmp.ne.s32.totalorder %s44, %s45
      %p56 = scmp.eq.s32.totalorder %s22, 0
      %p57 = por %p55, %p56
      %p58 = scmp.ne.s32.totalorder %s44, %s45
      %p59 = scmp.eq.s32.totalorder %s23, 3
      %p60 = por %p58, %p59
      %p62 = scmp.ne.s32.totalorder %s45, %s61
      %p63 = scmp.eq.s32.totalorder %s23, 0
      %p64 = por %p62, %p63
      %s66 = sadd.s32 %s65, 1
      %p69 = scmp.eq.s32.totalorder %s17, 3
      %p70 = scmp.ne.s32.totalorder %s65, %s67
      %p71 = scmp.eq.s32.totalorder %s17, 0
      %p72 = por %p70, %p71
      %p73 = scmp.ne.s32.totalorder %s65, %s67
      %p74 = scmp.eq.s32.totalorder %s22, 3
      %p75 = por %p73, %p74
      %p76 = scmp.ne.s32.totalorder %s67, %s68
      %p77 = scmp.eq.s32.totalorder %s22, 0
      %p78 = por %p76, %p77
      %p79 = scmp.ne.s32.totalorder %s67, %s68
      %p80 = scmp.eq.s32.totalorder %s23, 3
      %p81 = por %p79, %p80
      %p83 = scmp.ne.s32.totalorder %s68, %s82
      %p84 = scmp.eq.s32.totalorder %s23, 0
      %p85 = por %p83, %p84
      %s87 = sadd.s32 %s86, 1
      %p90 = scmp.eq.s32.totalorder %s17, 3
      %p91 = scmp.ne.s32.totalorder %s86, %s88
      %p92 = scmp.eq.s32.totalorder %s17, 0
      %p93 = por %p91, %p92
      %p94 = scmp.ne.s32.totalorder %s86, %s88
      %p95 = scmp.eq.s32.totalorder %s22, 3
      %p96 = por %p94, %p95
      %p97 = scmp.ne.s32.totalorder %s88, %s89
      %p98 = scmp.eq.s32.totalorder %s22, 0
      %p99 = por %p97, %p98
      %p100 = scmp.ne.s32.totalorder %s88, %s89
      %p101 = scmp.eq.s32.totalorder %s23, 3
      %p102 = por %p100, %p101
      %p104 = scmp.ne.s32.totalorder %s89, %s103
      %p105 = scmp.eq.s32.totalorder %s23, 0
      %p106 = por %p104, %p105
      %s107 = ssub.s32 %s24, %s36
      %s108 = ssub.s32 %s25, %s32
      %s109 = sor.u32 %s107, %s108
      %p110 = scmp.eq.s32.totalorder %s109, 0
      %s112 = sadd.s32 %s111, 1
      %s113 = scalar_select %p110, %s111, %s112
      %p116 = pneg %p110
      %p117 = scmp.eq.s32.totalorder %s17, 3
      %p118 = por %p116, %p117
      %p119 = scmp.ne.s32.totalorder %s111, %s114
      %p120 = scmp.eq.s32.totalorder %s17, 0
      %p121 = por %p119, %p120
      %p122 = scmp.ne.s32.totalorder %s111, %s114
      %p123 = scmp.eq.s32.totalorder %s22, 3
      %p124 = por %p122, %p123
      %p125 = scmp.ne.s32.totalorder %s114, %s115
      %p126 = scmp.eq.s32.totalorder %s22, 0
      %p127 = por %p125, %p126
      %p128 = scmp.ne.s32.totalorder %s114, %s115
      %p129 = scmp.eq.s32.totalorder %s23, 3
      %p130 = por %p128, %p129
      %p132 = scmp.ne.s32.totalorder %s115, %s131
      %p133 = scmp.eq.s32.totalorder %s23, 0
      %p134 = por %p132, %p133
      %p135 = scmp.le.s32.totalorder 1, %s17
      %p136 = scmp.lt.s32.totalorder %s17, 5
      %p137 = pnand %p135, %p136
      %p138 = pneg %p137
      // Predicated region
      $region9: #{tpu_custom_call.1} parent=5 // pred_check
        _
      $region10: #{tpu_custom_call.1} parent=5 // pred_check_branch
        %140 = sbr.rel (%p137) target = $region12
      $region11: #{tpu_custom_call.1} parent=5 // pred_region
        %s141 = ssub.s32 %s17, 1
        // Predicated region
        $region13: #{tpu_custom_call.1} parent=11 // pred_check
          %p142 = pneg %p78
        $region14: #{tpu_custom_call.1} parent=11 // pred_check_branch
          %144 = sbr.rel (%p142) target = $region16
        $region15: #{tpu_custom_call.1} parent=11 // pred_region
          %s146 = ssub.s32 64, 64
          %147 = vsyncadd [#allocation5], %s146
          %150 = dma.hbm_to_smem %s1, 64, [#allocation7], [#allocation5]
        $region16: #{tpu_custom_call.1} parent=11 // pred_fallthru
          _
        // Predicated region
        $region17: #{tpu_custom_call.1} parent=11 // pred_check
          %p151 = pneg %p99
        $region18: #{tpu_custom_call.1} parent=11 // pred_check_branch
          %153 = sbr.rel (%p151) target = $region20
        $region19: #{tpu_custom_call.1} parent=11 // pred_region
          %s155 = ssub.s32 16, 16
          %156 = vsyncadd [#allocation6], %s155
          %s158 = sshll.u32 %s2, 4
          %s159 = int_to_ptr.vmem [resolvable:$true] %s158
          %161 = dma.vmem_to_smem %s159, 16, [#allocation8], [#allocation6]
        $region20: #{tpu_custom_call.1} parent=11 // pred_fallthru
          _
      $region12: #{tpu_custom_call.1} parent=5 // pred_fallthru
        _
      %p162 = scmp.lt.s32.totalorder %s17, 4
      // Predicated region
      $region21: #{tpu_custom_call.1} parent=5 // pred_check
        %p163 = pneg %p162
      $region22: #{tpu_custom_call.1} parent=5 // pred_check_branch
        %165 = sbr.rel (%p163) target = $region24
      $region23: #{tpu_custom_call.1} parent=5 // pred_region
        // Predicated region
        $region25: #{tpu_custom_call.1} parent=23 // pred_check
          %p166 = pneg %p51
        $region26: #{tpu_custom_call.1} parent=23 // pred_check_branch
          %168 = sbr.rel (%p166) target = $region28
        $region27: #{tpu_custom_call.1} parent=23 // pred_region
          #allocation11 [shape = 'u32[6]{0}', space=smem, size = 0x18, scoped, tag = 'DMA stride descriptor']
          %s169 = sand.u32 %s41, 1
          %s170 = scalar_lea.sflag [#allocation3], %s169
          %s171 = sand.u32 %s41, 1
          %s172 = smul.addr %s171, 64
          %s173 = scalar_lea.vmem [#allocation2], %s172
          %s174 = smul.u32 2, %s25
          %s176 = ssub.s32 1024, 1024
          %177 = vsyncadd %s170, %s176
          %s178 = smul.addr %s24, 16
          %s179 = sadd.s32 %s174, %s178
          %s180 = smul.addr %s179, 128
          %s181 = scalar_lea.hbm %s0, %s180
          %s183 = sshll.u32 1, 14
          %s184 = sxor.u32 4294967295, %s183
          %s186 = sld [smem:[#allocation0]]
          %s187 = sadd.s32 2, %s186
          %s189 = sshll.u32 7, 26
          %s190 = sxor.u32 4294967295, %s189
          %s191 = sand.u32 0, %s190
          %s192 = sshll.u32 %s187, 26
          %s193 = sor.u32 %s191, %s192
          %s194 = sshll.u32 %s173, 4
          %s195 = int_to_ptr.vmem [resolvable:$true] %s194
          %201 = sst [smem:[#allocation11]] 512
          %s202 = scalar_lea.smem [#allocation11], 1
          %203 = sst [smem:[%s202]] 256
          %s204 = scalar_lea.smem [#allocation11], 2
          %205 = sst [smem:[%s204]] 2
          %s206 = scalar_lea.smem [#allocation11], 3
          %207 = sst [smem:[%s206]] 128
          %s208 = scalar_lea.smem [#allocation11], 4
          %209 = sst [smem:[%s208]] 128
          %s210 = scalar_lea.smem [#allocation11], 5
          %211 = sst [smem:[%s210]] 8
          %213 = dma.general %s181, 1024, %s195, %s170, [#allocation10], [#allocation11], %s193, 0
        $region28: #{tpu_custom_call.1} parent=23 // pred_fallthru
          _
      $region24: #{tpu_custom_call.1} parent=5 // pred_fallthru
        _
      %p214 = scmp.le.s32.totalorder 1, %s17
      %p215 = scmp.lt.s32.totalorder %s17, 5
      %p216 = pnand %p214, %p215
      %p217 = pneg %p216
      // Predicated region
      $region29: #{tpu_custom_call.1} parent=5 // pred_check
        _
      $region30: #{tpu_custom_call.1} parent=5 // pred_check_branch
        %219 = sbr.rel (%p216) target = $region32
      $region31: #{tpu_custom_call.1} parent=5 // pred_region
        %s220 = ssub.s32 %s17, 1
        %s221 = sand.u32 %s44, 1
        %s222 = scalar_lea.sflag [#allocation3], %s221
        %s223 = sand.u32 %s44, 1
        %s224 = smul.addr %s223, 64
        %s225 = scalar_lea.vmem [#allocation2], %s224
        // Predicated region
        $region33: #{tpu_custom_call.1} parent=31 // pred_check
          %p226 = pneg %p57
        $region34: #{tpu_custom_call.1} parent=31 // pred_check_branch
          %228 = sbr.rel (%p226) target = $region36
        $region35: #{tpu_custom_call.1} parent=31 // pred_region
          %229 = dma.done %s222, 1024
        $region36: #{tpu_custom_call.1} parent=31 // pred_fallthru
          _
        // Predicated region
        $region37: #{tpu_custom_call.1} parent=31 // pred_check
          %p230 = pneg %p78
        $region38: #{tpu_custom_call.1} parent=31 // pred_check_branch
          %232 = sbr.rel (%p230) target = $region40
        $region39: #{tpu_custom_call.1} parent=31 // pred_region
          %233 = dma.done [#allocation5], 64
        $region40: #{tpu_custom_call.1} parent=31 // pred_fallthru
          _
        // Predicated region
        $region41: #{tpu_custom_call.1} parent=31 // pred_check
          %p234 = pneg %p99
        $region42: #{tpu_custom_call.1} parent=31 // pred_check_branch
          %236 = sbr.rel (%p234) target = $region44
        $region43: #{tpu_custom_call.1} parent=31 // pred_region
          %237 = dma.done [#allocation6], 16
        $region44: #{tpu_custom_call.1} parent=31 // pred_fallthru
          _
        %238 = sfence
        %s239 = sand.u32 %s44, 1
        %s240 = scalar_lea.sflag [#allocation3], %s239
        %s241 = sand.u32 %s44, 1
        %s242 = smul.addr %s241, 64
        %s243 = scalar_lea.vmem [#allocation2], %s242
        %p244 = pneg %p57
        %p245 = pneg %p54
        %p246 = pneg %p78
        %p247 = pneg %p75
        %p248 = pneg %p99
        %p249 = pneg %p96
        %p250 = pneg %p127
        %p251 = pneg %p124
        %s252 = sand.u32 %s114, 1
        %s253 = scalar_lea.sflag [#allocation4], %s252
        %s254 = sand.u32 %s114, 1
        %s255 = smul.addr %s254, 48
        %s256 = scalar_lea.vmem [#allocation9], %s255
        %s257 = smul.u32 2, %s27
        %s258 = smul.u32 2, %s27
        %v259 = vld [vmem:[%s225] sm:$0xff]
        %v260 = vld [vmem:[%s225 + $0x8] sm:$0xff]
        %s261 = sld [smem:[#allocation7]]
        %v262 = vstv %s261
        %v263 = vmul.f32 %v259, %v262
        %v264 = vmul.f32 %v260, %v262
        %s265 = sld [smem:[#allocation7 + $0x80]]
        %v266 = vstv %s265
        %v267 = vmul.f32 %v259, %v266
        %v268 = vmul.f32 %v260, %v266
        %s269 = sld [smem:[#allocation7 + $0x100]]
        %v270 = vstv %s269
        %v271 = vmul.f32 %v259, %v270
        %v272 = vmul.f32 %v260, %v270
        %s273 = scalar_lea.vmem %s225, 16 [#allocation2]
        %v274 = vld [vmem:[%s273] sm:$0xff]
        %v275 = vld [vmem:[%s273 + $0x8] sm:$0xff]
        %s276 = sld [smem:[#allocation7 + $0x1]]
        %v277 = vstv %s276
        %v278 = vmul.f32 %v274, %v277
        %v279 = vmul.f32 %v275, %v277
        %v280 = vadd.f32 %v263, %v278
        %v281 = vadd.f32 %v264, %v279
        %s282 = sld [smem:[#allocation7 + $0x81]]
        %v283 = vstv %s282
        %v284 = vmul.f32 %v274, %v283
        %v285 = vmul.f32 %v275, %v283
        %v286 = vadd.f32 %v267, %v284
        %v287 = vadd.f32 %v268, %v285
        %s288 = sld [smem:[#allocation7 + $0x101]]
        %v289 = vstv %s288
        %v290 = vmul.f32 %v274, %v289
        %v291 = vmul.f32 %v275, %v289
        %v292 = vadd.f32 %v271, %v290
        %v293 = vadd.f32 %v272, %v291
        %s294 = scalar_lea.vmem %s225, 32 [#allocation2]
        %v295 = vld [vmem:[%s294] sm:$0xff]
        %v296 = vld [vmem:[%s294 + $0x8] sm:$0xff]
        %s297 = sld [smem:[#allocation7 + $0x2]]
        %v298 = vstv %s297
        %v299 = vmul.f32 %v295, %v298
        %v300 = vmul.f32 %v296, %v298
        %v301 = vadd.f32 %v280, %v299
        %v302 = vadd.f32 %v281, %v300
        %s303 = sld [smem:[#allocation7 + $0x82]]
        %v304 = vstv %s303
        %v305 = vmul.f32 %v295, %v304
        %v306 = vmul.f32 %v296, %v304
        %v307 = vadd.f32 %v286, %v305
        %v308 = vadd.f32 %v287, %v306
        %s309 = sld [smem:[#allocation7 + $0x102]]
        %v310 = vstv %s309
        %v311 = vmul.f32 %v295, %v310
        %v312 = vmul.f32 %v296, %v310
        %v313 = vadd.f32 %v292, %v311
        %v314 = vadd.f32 %v293, %v312
        %s315 = scalar_lea.vmem %s225, 48 [#allocation2]
        %v316 = vld [vmem:[%s315] sm:$0xff]
        %v317 = vld [vmem:[%s315 + $0x8] sm:$0xff]
        %s318 = sld [smem:[#allocation7 + $0x3]]
        %v319 = vstv %s318
        %v320 = vmul.f32 %v316, %v319
        %v321 = vmul.f32 %v317, %v319
        %v322 = vadd.f32 %v301, %v320
        %v323 = vadd.f32 %v302, %v321
        %s324 = sld [smem:[#allocation7 + $0x83]]
        %v325 = vstv %s324
        %v326 = vmul.f32 %v316, %v325
        %v327 = vmul.f32 %v317, %v325
        %v328 = vadd.f32 %v307, %v326
        %v329 = vadd.f32 %v308, %v327
        %s330 = sld [smem:[#allocation7 + $0x103]]
        %v331 = vstv %s330
        %v332 = vmul.f32 %v316, %v331
        %v333 = vmul.f32 %v317, %v331
        %v334 = vadd.f32 %v313, %v332
        %v335 = vadd.f32 %v314, %v333
        %s336 = sld [smem:[#allocation8]]
        %v337 = vstv %s336
        %v338 = vadd.f32 %v322, %v337
        %v339 = vadd.f32 %v323, %v337
        %340 = vst [vmem:[%s256] sm:$0xff] %v338
        %341 = vst [vmem:[%s256 + $0x8] sm:$0xff] %v339
        %s342 = sld [smem:[#allocation8 + $0x1]]
        %v343 = vstv %s342
        %v344 = vadd.f32 %v328, %v343
        %v345 = vadd.f32 %v329, %v343
        %s346 = scalar_lea.vmem %s256, 16 [#allocation9]
        %347 = vst [vmem:[%s346] sm:$0xff] %v344
        %348 = vst [vmem:[%s346 + $0x8] sm:$0xff] %v345
        %s349 = sld [smem:[#allocation8 + $0x2]]
        %v350 = vstv %s349
        %v351 = vadd.f32 %v334, %v350
        %v352 = vadd.f32 %v335, %v350
        %s353 = scalar_lea.vmem %s256, 32 [#allocation9]
        %354 = vst [vmem:[%s353] sm:$0xff] %v351
        %355 = vst [vmem:[%s353 + $0x8] sm:$0xff] %v352
        %s356 = sand.u32 %s114, 1
        %s357 = scalar_lea.sflag [#allocation4], %s356
        %s358 = sand.u32 %s114, 1
        %s359 = smul.addr %s358, 48
        %s360 = scalar_lea.vmem [#allocation9], %s359
        // Predicated region
        $region45: #{tpu_custom_call.1} parent=31 // pred_check
          %p361 = pneg %p124
        $region46: #{tpu_custom_call.1} parent=31 // pred_check_branch
          %363 = sbr.rel (%p361) target = $region48
        $region47: #{tpu_custom_call.1} parent=31 // pred_region
          #allocation13 [shape = 'u32[6]{0}', space=smem, size = 0x18, scoped, tag = 'DMA stride descriptor']
          %s364 = smul.u32 2, %s27
          %s366 = ssub.s32 768, 768
          %367 = vsyncadd %s357, %s366
          %s368 = smul.addr %s26, 12
          %s369 = sadd.s32 %s364, %s368
          %s370 = smul.addr %s369, 128
          %s371 = scalar_lea.hbm %s3, %s370
          %s373 = sshll.u32 1, 14
          %s374 = sxor.u32 4294967295, %s373
          %s377 = sshll.u32 7, 18
          %s378 = sxor.u32 4294967295, %s377
          %s379 = sand.u32 0, %s378
          %s381 = sor.u32 %s379, 0
          %s383 = sshll.u32 3, 24
          %s384 = sxor.u32 4294967295, %s383
          %s385 = sand.u32 %s381, %s384
          %s387 = sor.u32 %s385, 0
          %s388 = sshll.u32 %s360, 4
          %s389 = int_to_ptr.vmem [resolvable:$true] %s388
          %395 = sst [smem:[#allocation13]] 256
          %s396 = scalar_lea.smem [#allocation13], 1
          %397 = sst [smem:[%s396]] 512
          %s398 = scalar_lea.smem [#allocation13], 2
          %399 = sst [smem:[%s398]] 2
          %s400 = scalar_lea.smem [#allocation13], 3
          %401 = sst [smem:[%s400]] 128
          %s402 = scalar_lea.smem [#allocation13], 4
          %403 = sst [smem:[%s402]] 128
          %s404 = scalar_lea.smem [#allocation13], 5
          %405 = sst [smem:[%s404]] 8
          %407 = dma.general %s389, 768, %s371, %s357, [#allocation12], [#allocation13], %s387, 0
        $region48: #{tpu_custom_call.1} parent=31 // pred_fallthru
          _
      $region32: #{tpu_custom_call.1} parent=5 // pred_fallthru
        _
      %p408 = scmp.le.s32.totalorder 2, %s17
      // Predicated region
      $region49: #{tpu_custom_call.1} parent=5 // pred_check
        %p409 = pneg %p408
      $region50: #{tpu_custom_call.1} parent=5 // pred_check_branch
        %411 = sbr.rel (%p409) target = $region52
      $region51: #{tpu_custom_call.1} parent=5 // pred_region
        %s412 = ssub.s32 %s17, 2
        // Predicated region
        $region53: #{tpu_custom_call.1} parent=51 // pred_check
          %p413 = pneg %p130
        $region54: #{tpu_custom_call.1} parent=51 // pred_check_branch
          %415 = sbr.rel (%p413) target = $region56
        $region55: #{tpu_custom_call.1} parent=51 // pred_region
          %s416 = sand.u32 %s115, 1
          %s417 = scalar_lea.sflag [#allocation4], %s416
          %s418 = sand.u32 %s115, 1
          %s419 = smul.addr %s418, 48
          %s420 = scalar_lea.vmem [#allocation9], %s419
          %421 = dma.done %s417, 768
        $region56: #{tpu_custom_call.1} parent=51 // pred_fallthru
          _
      $region52: #{tpu_custom_call.1} parent=5 // pred_fallthru
        _
    $region6: #{tpu_custom_call.1} parent=1 // loop_footer
      %s21 = sadd.s32 1, %s17
    $region7: #{tpu_custom_call.1} parent=1 // loop_footer_branch
      %16 = sbr.rel target = $region3
    $region8: #{tpu_custom_call.1} parent=1 // loop_exit
      _
    %422 = vsyncpa [#allocation3], 1
    %s423 = scalar_lea.sflag [#allocation3], 1
    %424 = vsyncpa %s423, 1
    %425 = vsyncpa [#allocation4], 1
    %s426 = scalar_lea.sflag [#allocation4], 1
    %427 = vsyncpa %s426, 1
    %428 = vsyncpa [#allocation5], 1
    %s429 = scalar_lea.sflag [#allocation5], 1
    %430 = vsyncpa %s429, 1
    %431 = vsyncpa [#allocation6], 1
    %s432 = scalar_lea.sflag [#allocation6], 1
    %433 = vsyncpa %s432, 1

</llo_original>
